<compile_context>
chip_gen: v5e
topology: v5e:2x2
jax: 0.10.0
libtpu: 0.0.40
codegen_flags: <defaults>
</compile_context>

<pallas_src>
import jax
import jax.numpy as jnp
from jax import lax
from jax.experimental import pallas as pl
from jax.experimental.pallas import tpu as pltpu


_LANES = 128
_SUBLANES = 8


def _tile_loss_sum(x, conf, base, B):
    """Masked loss contribution (sum over rows) of one (TB, C) tile."""
    TB = x.shape[0]
    rows = lax.broadcasted_iota(jnp.int32, (TB, 1), 0) + base
    valid = rows < B                       # ragged / fully-out-of-range tiles -> 0
    x = jnp.where(valid, x, 0.0)
    conf = jnp.where(valid, conf, 0.0)
    # Numerically stable, folded log-softmax:
    #   sum(log_softmax(x) * conf, 1) = sum((x - m) * conf, 1) - lse * sum(conf, 1)
    m = jnp.max(x, axis=1, keepdims=True)
    shifted = x - m
    lse = jnp.log(jnp.sum(jnp.exp(shifted), axis=1, keepdims=True))
    per_row = (jnp.sum(shifted * conf, axis=1, keepdims=True)
               - lse * jnp.sum(conf, axis=1, keepdims=True))      # (TB, 1)
    return jnp.sum(per_row)


def _write_partial(loss_ref, acc):
    """Write the chunk's partial sum into element [0, 0] of its lane-dense block."""
    r = lax.broadcasted_iota(jnp.int32, loss_ref.shape, 0)
    c = lax.broadcasted_iota(jnp.int32, loss_ref.shape, 1)
    loss_ref[...] = jnp.where((r == 0) & (c == 0), acc[...], 0.0)


def _make_vmem_gather_kernel(B, C, TB, nj):
    """Path A: confidence resident in VMEM, per-row VMEM gather (no DMA)."""

    def kernel(idx_ref, out_ref, conf_ref, loss_ref, gbuf, acc):
        # idx_ref : (B,) int32 in SMEM (scalar-prefetched batch -> dataset row)
        # out_ref : (TB, C) logits tile (auto-pipelined)
        # conf_ref: (N, C) confidence table, VMEM-resident (constant block index)
        # loss_ref: (8, 128) per-chunk partial-sum block
        # gbuf    : (TB, C) VMEM scratch holding this tile's gathered rows
        # acc     : (1, 1) f32 running sum for this chunk
        p = pl.program_id(0)
        j = pl.program_id(1)
        base = (p * nj + j) * TB

        @pl.when(j == 0)
        def _():
            acc[...] = jnp.zeros_like(acc)

        # Gather TB confidence rows from the VMEM-resident table: one dynamic
        # VMEM load + one dynamic VMEM store per row, no DMA descriptors.
        def gather_row(r, carry):
            pos = jnp.minimum(base + r, B - 1)            # clamp on ragged tiles
            src = idx_ref[pos]
            gbuf[pl.ds(r, 1), :] = conf_ref[pl.ds(src, 1), :]
            return carry

        lax.fori_loop(0, TB, gather_row, 0, unroll=8)

        x = out_ref[...].astype(jnp.float32)
        conf = gbuf[...].astype(jnp.float32)
        acc[...] = acc[...] + _tile_loss_sum(x, conf, base, B)

        @pl.when(j == nj - 1)
        def _():
            _write_partial(loss_ref, acc)

    return kernel


def _make_streamed_kernel(B, C, TB, nj):
    """Path B: pre-gathered (B, C) confidence rows streamed as a second input."""

    def kernel(out_ref, conf_ref, loss_ref, acc):
        p = pl.program_id(0)
        j = pl.program_id(1)
        base = (p * nj + j) * TB

        @pl.when(j == 0)
        def _():
            acc[...] = jnp.zeros_like(acc)

        acc[...] = acc[...] + _tile_loss_sum(
            out_ref[...].astype(jnp.float32),
            conf_ref[...].astype(jnp.float32),
            base, B)

        @pl.when(j == nj - 1)
        def _():
            _write_partial(loss_ref, acc)

    return kernel


def partial_loss_forward(outputs, confidence, index, *,
                         block_rows=None, gather_in_kernel=None):
    """outputs: (B, C) float, confidence: (N, C) float, index: (B,) int."""
    B, C = outputs.shape
    N, C2 = confidence.shape
    assert C == C2, (outputs.shape, confidence.shape)
    index = index.astype(jnp.int32)

    x_item = jnp.dtype(outputs.dtype).itemsize
    c_item = jnp.dtype(confidence.dtype).itemsize

    # ---- generation-aware VMEM budget --------------------------------------
    try:
        phys = int(pltpu.get_tpu_info().vmem_capacity_bytes)
    except Exception:
        phys = 64 << 20                      # conservative (v7x-sized) fallback
    # <= 48 MiB on v7x (64 MiB physical), <= 72 MiB on v5e/v6e (128 MiB physical)
    vmem_limit = int(min(phys * 3 // 4, 72 << 20))
    usable = int(vmem_limit * 0.8)           # headroom for Mosaic internal scratch

    conf_resident_bytes = 2 * N * C * c_item          # conservative (double-buffered)
    if gather_in_kernel is None:
        gather_in_kernel = conf_resident_bytes <= (2 * usable) // 3

    # Sublane-pack-aligned tile rows: 8 for f32, 16 for bf16, 32 for int8/fp8.
    min_item = int(min(x_item, c_item))
    pack = _SUBLANES * max(1, 4 // min_item)

    if block_rows is None:
        if gather_in_kernel:
            row_bytes = C * (2 * x_item + c_item)      # logits dbl-buf + gather scratch
            row_budget = max(usable - conf_resident_bytes, pack * row_bytes)
        else:
            row_bytes = 2 * C * (x_item + c_item)      # logits + gathered rows, dbl-buf
            row_budget = usable
        tb = min(row_budget // row_bytes, 2048)        # cap raised per review
        if tb >= B:
            tb = B
        else:
            tb = max(pack, (tb // pack) * pack)
        block_rows = int(tb)

    TB = int(min(block_rows, B))
    if TB < B and TB % pack != 0:
        TB = max(pack, (TB // pack) * pack)
    TB = min(TB, B)

    nt = (B + TB - 1) // TB                  # total row tiles
    P = 2 if nt >= 2 else 1                  # 2 chunks -> both v7x TensorCores
    nj = (nt + P - 1) // P                   # tiles per chunk
    nt_clamp = nt - 1                        # clamp fully-out-of-range block indices

    out_shape = jax.ShapeDtypeStruct((P * _SUBLANES, _LANES), jnp.float32)
    compiler_params = pltpu.CompilerParams(
        dimension_semantics=("parallel", "arbitrary"),
        vmem_limit_bytes=vmem_limit)

    if gather_in_kernel:
        kernel = _make_vmem_gather_kernel(B, C, TB, nj)
        partials = pl.pallas_call(
            kernel,
            out_shape=out_shape,
            grid_spec=pltpu.PrefetchScalarGridSpec(
                num_scalar_prefetch=1,                       # index -> SMEM
                grid=(P, nj),
                in_specs=[
                    pl.BlockSpec(
                        (TB, C),
                        lambda p, j, idx: (jnp.minimum(p * nj + j, nt_clamp), 0)),
                    pl.BlockSpec((N, C), lambda p, j, idx: (0, 0)),   # VMEM-resident
                ],
                out_specs=pl.BlockSpec((_SUBLANES, _LANES),
                                       lambda p, j, idx: (p, 0)),
                scratch_shapes=[
                    pltpu.VMEM((TB, C), confidence.dtype),   # gathered rows
                    pltpu.VMEM((1, 1), jnp.float32),         # running loss sum
                ],
            ),
            compiler_params=compiler_params,
        )(index, outputs, confidence)
    else:
        # TODO(synk): for huge confidence tables with large (>512 B) rows an
        # in-kernel double-buffered HBM DMA gather would avoid materializing
        # (B, C); the streamed XLA gather below is the robust general fallback.
        conf_rows = jnp.take(confidence, index, axis=0)      # (B, C) at full HBM BW
        kernel = _make_streamed_kernel(B, C, TB, nj)
        partials = pl.pallas_call(
            kernel,
            out_shape=out_shape,
            grid_spec=pltpu.PrefetchScalarGridSpec(
                num_scalar_prefetch=0,
                grid=(P, nj),
                in_specs=[
                    pl.BlockSpec(
                        (TB, C),
                        lambda p, j: (jnp.minimum(p * nj + j, nt_clamp), 0)),
                    pl.BlockSpec(
                        (TB, C),
                        lambda p, j: (jnp.minimum(p * nj + j, nt_clamp), 0)),
                ],
                out_specs=pl.BlockSpec((_SUBLANES, _LANES), lambda p, j: (p, 0)),
                scratch_shapes=[pltpu.VMEM((1, 1), jnp.float32)],
            ),
            compiler_params=compiler_params,
        )(outputs, conf_rows)

    return -jnp.sum(partials) / B


def partial_loss_forward_ref(outputs, confidence, index):
    """Pure-JAX reference of the PyTorch forward, for verification."""
    logsm = jax.nn.log_softmax(outputs.astype(jnp.float32), axis=1)
    final = logsm * confidence[index, :].astype(jnp.float32)
    return -jnp.mean(jnp.sum(final, axis=1))


if __name__ == "__main__":
    master = jax.random.PRNGKey(0)

    def make_case(key, B, C, N):
        k1, k2, k3 = jax.random.split(key, 3)
        outputs = jax.random.normal(k1, (B, C), dtype=jnp.float32)
        confidence = jax.nn.softmax(
            jax.random.normal(k2, (N, C), dtype=jnp.float32), axis=1)
        index = jax.random.randint(k3, (B,), 0, N, dtype=jnp.int32)
        return outputs, confidence, index

    ka, kb, kc = jax.random.split(master, 3)

    # Case 1: VMEM-resident confidence path, single tile.
    o1, c1, i1 = make_case(ka, 8, 16, 32)
    l1 = jax.block_until_ready(partial_loss_forward(o1, c1, i1))
    r1 = partial_loss_forward_ref(o1, c1, i1)
    assert jnp.allclose(l1, r1, rtol=1e-5, atol=1e-5), (l1, r1)

    # Case 2: multi-tile pipeline, ragged last tile, 2-chunk parallel split
    # (one fully-out-of-range tile exercises the clamp + mask path).
    o2, c2, i2 = make_case(kb, 20, 16, 64)
    l2 = jax.block_until_ready(partial_loss_forward(o2, c2, i2, block_rows=8))
    r2 = partial_loss_forward_ref(o2, c2, i2)
    assert jnp.allclose(l2, r2, rtol=1e-5, atol=1e-5), (l2, r2)

    # Case 3: streamed-gather fallback path (force confidence "too big" for VMEM).
    o3, c3, i3 = make_case(kc, 24, 8, 40)
    l3 = jax.block_until_ready(
        partial_loss_forward(o3, c3, i3, block_rows=8, gather_in_kernel=False))
    r3 = partial_loss_forward_ref(o3, c3, i3)
    assert jnp.allclose(l3, r3, rtol=1e-5, atol=1e-5), (l3, r3)

    print("KERNEL_OK")
</pallas_src>

<mosaic_0001>
module attributes {stable_mosaic.version = 11 : i64} {
  func.func @kernel(%arg0: i32, %arg1: i32, %arg2: memref<8xi32, #tpu.memory_space<smem>>, %arg3: memref<8x16xf32, #tpu.memory_space<vmem>>, %arg4: memref<32x16xf32, #tpu.memory_space<vmem>>, %arg5: memref<8x128xf32, #tpu.memory_space<vmem>>, %arg6: memref<8x16xf32, #tpu.memory_space<vmem>>, %arg7: memref<1x1xf32, #tpu.memory_space<vmem>>) attributes {dimension_semantics = [#tpu.dimension_semantics<parallel>, #tpu.dimension_semantics<arbitrary>], iteration_bounds = array<i64: 1, 1>, scalar_prefetch = 1 : i64, scratch_operands = 2 : i64, tpu.core_type = #tpu.core_type<tc>, window_params = [{transform_indices = @transform_0, window_bounds = array<i64: 8, 16>}, {pipeline_mode = #tpu.pipeline_mode<synchronous>, transform_indices = @transform_1, window_bounds = array<i64: 32, 16>}, {transform_indices = @transform_2, window_bounds = array<i64: 8, 128>}]} {
    %c1_i32 = arith.constant 1 : i32
    %0 = arith.muli %arg0, %c1_i32 : i32
    %1 = arith.addi %0, %arg1 : i32
    %c8_i32 = arith.constant 8 : i32
    %2 = arith.muli %1, %c8_i32 : i32
    %c0_i32 = arith.constant 0 : i32
    %3 = arith.cmpi eq, %arg1, %c0_i32 : i32
    %4 = arith.extui %3 : i1 to i32
    %c0_i32_0 = arith.constant 0 : i32
    %5 = arith.cmpi ne, %4, %c0_i32_0 : i32
    scf.if %5 {
      %cst_44 = arith.constant 0.000000e+00 : f32
      %111 = vector.broadcast %cst_44 : f32 to vector<1x1xf32>
      %c0_45 = arith.constant 0 : index
      %c0_46 = arith.constant 0 : index
      %112 = vector.load %arg7[%c0_45, %c0_46] : memref<1x1xf32, #tpu.memory_space<vmem>>, vector<1x1xf32>
      tpu.vector_store %arg7[%c0_45, %c0_46], %111 {strides = array<i32>} : memref<1x1xf32, #tpu.memory_space<vmem>>, vector<1x1xf32>,
    } else {
    }
    %c0_i32_1 = arith.constant 0 : i32
    %6 = arith.addi %2, %c0_i32_1 : i32
    %c7_i32 = arith.constant 7 : i32
    %7 = arith.minsi %6, %c7_i32 : i32
    %8 = arith.index_cast %7 : i32 to index
    %9 = memref.load %arg2[%8] : memref<8xi32, #tpu.memory_space<smem>>
    %10 = arith.index_cast %9 : i32 to index
    %c0 = arith.constant 0 : index
    %11 = vector.load %arg4[%10, %c0] : memref<32x16xf32, #tpu.memory_space<vmem>>, vector<1x16xf32>
    %12 = arith.index_cast %c0_i32_1 : i32 to index
    %c0_2 = arith.constant 0 : index
    %13 = vector.load %arg6[%12, %c0_2] : memref<8x16xf32, #tpu.memory_space<vmem>>, vector<1x16xf32>
    tpu.vector_store %arg6[%12, %c0_2], %11 {strides = array<i32>} : memref<8x16xf32, #tpu.memory_space<vmem>>, vector<1x16xf32>,
    %c1_i32_3 = arith.constant 1 : i32
    %14 = arith.addi %2, %c1_i32_3 : i32
    %c7_i32_4 = arith.constant 7 : i32
    %15 = arith.minsi %14, %c7_i32_4 : i32
    %16 = arith.index_cast %15 : i32 to index
    %17 = memref.load %arg2[%16] : memref<8xi32, #tpu.memory_space<smem>>
    %18 = arith.index_cast %17 : i32 to index
    %c0_5 = arith.constant 0 : index
    %19 = vector.load %arg4[%18, %c0_5] : memref<32x16xf32, #tpu.memory_space<vmem>>, vector<1x16xf32>
    %20 = arith.index_cast %c1_i32_3 : i32 to index
    %c0_6 = arith.constant 0 : index
    %21 = vector.load %arg6[%20, %c0_6] : memref<8x16xf32, #tpu.memory_space<vmem>>, vector<1x16xf32>
    tpu.vector_store %arg6[%20, %c0_6], %19 {strides = array<i32>} : memref<8x16xf32, #tpu.memory_space<vmem>>, vector<1x16xf32>,
    %c2_i32 = arith.constant 2 : i32
    %22 = arith.addi %2, %c2_i32 : i32
    %c7_i32_7 = arith.constant 7 : i32
    %23 = arith.minsi %22, %c7_i32_7 : i32
    %24 = arith.index_cast %23 : i32 to index
    %25 = memref.load %arg2[%24] : memref<8xi32, #tpu.memory_space<smem>>
    %26 = arith.index_cast %25 : i32 to index
    %c0_8 = arith.constant 0 : index
    %27 = vector.load %arg4[%26, %c0_8] : memref<32x16xf32, #tpu.memory_space<vmem>>, vector<1x16xf32>
    %28 = arith.index_cast %c2_i32 : i32 to index
    %c0_9 = arith.constant 0 : index
    %29 = vector.load %arg6[%28, %c0_9] : memref<8x16xf32, #tpu.memory_space<vmem>>, vector<1x16xf32>
    tpu.vector_store %arg6[%28, %c0_9], %27 {strides = array<i32>} : memref<8x16xf32, #tpu.memory_space<vmem>>, vector<1x16xf32>,
    %c3_i32 = arith.constant 3 : i32
    %30 = arith.addi %2, %c3_i32 : i32
    %c7_i32_10 = arith.constant 7 : i32
    %31 = arith.minsi %30, %c7_i32_10 : i32
    %32 = arith.index_cast %31 : i32 to index
    %33 = memref.load %arg2[%32] : memref<8xi32, #tpu.memory_space<smem>>
    %34 = arith.index_cast %33 : i32 to index
    %c0_11 = arith.constant 0 : index
    %35 = vector.load %arg4[%34, %c0_11] : memref<32x16xf32, #tpu.memory_space<vmem>>, vector<1x16xf32>
    %36 = arith.index_cast %c3_i32 : i32 to index
    %c0_12 = arith.constant 0 : index
    %37 = vector.load %arg6[%36, %c0_12] : memref<8x16xf32, #tpu.memory_space<vmem>>, vector<1x16xf32>
    tpu.vector_store %arg6[%36, %c0_12], %35 {strides = array<i32>} : memref<8x16xf32, #tpu.memory_space<vmem>>, vector<1x16xf32>,
    %c4_i32 = arith.constant 4 : i32
    %38 = arith.addi %2, %c4_i32 : i32
    %c7_i32_13 = arith.constant 7 : i32
    %39 = arith.minsi %38, %c7_i32_13 : i32
    %40 = arith.index_cast %39 : i32 to index
    %41 = memref.load %arg2[%40] : memref<8xi32, #tpu.memory_space<smem>>
    %42 = arith.index_cast %41 : i32 to index
    %c0_14 = arith.constant 0 : index
    %43 = vector.load %arg4[%42, %c0_14] : memref<32x16xf32, #tpu.memory_space<vmem>>, vector<1x16xf32>
    %44 = arith.index_cast %c4_i32 : i32 to index
    %c0_15 = arith.constant 0 : index
    %45 = vector.load %arg6[%44, %c0_15] : memref<8x16xf32, #tpu.memory_space<vmem>>, vector<1x16xf32>
    tpu.vector_store %arg6[%44, %c0_15], %43 {strides = array<i32>} : memref<8x16xf32, #tpu.memory_space<vmem>>, vector<1x16xf32>,
    %c5_i32 = arith.constant 5 : i32
    %46 = arith.addi %2, %c5_i32 : i32
    %c7_i32_16 = arith.constant 7 : i32
    %47 = arith.minsi %46, %c7_i32_16 : i32
    %48 = arith.index_cast %47 : i32 to index
    %49 = memref.load %arg2[%48] : memref<8xi32, #tpu.memory_space<smem>>
    %50 = arith.index_cast %49 : i32 to index
    %c0_17 = arith.constant 0 : index
    %51 = vector.load %arg4[%50, %c0_17] : memref<32x16xf32, #tpu.memory_space<vmem>>, vector<1x16xf32>
    %52 = arith.index_cast %c5_i32 : i32 to index
    %c0_18 = arith.constant 0 : index
    %53 = vector.load %arg6[%52, %c0_18] : memref<8x16xf32, #tpu.memory_space<vmem>>, vector<1x16xf32>
    tpu.vector_store %arg6[%52, %c0_18], %51 {strides = array<i32>} : memref<8x16xf32, #tpu.memory_space<vmem>>, vector<1x16xf32>,
    %c6_i32 = arith.constant 6 : i32
    %54 = arith.addi %2, %c6_i32 : i32
    %c7_i32_19 = arith.constant 7 : i32
    %55 = arith.minsi %54, %c7_i32_19 : i32
    %56 = arith.index_cast %55 : i32 to index
    %57 = memref.load %arg2[%56] : memref<8xi32, #tpu.memory_space<smem>>
    %58 = arith.index_cast %57 : i32 to index
    %c0_20 = arith.constant 0 : index
    %59 = vector.load %arg4[%58, %c0_20] : memref<32x16xf32, #tpu.memory_space<vmem>>, vector<1x16xf32>
    %60 = arith.index_cast %c6_i32 : i32 to index
    %c0_21 = arith.constant 0 : index
    %61 = vector.load %arg6[%60, %c0_21] : memref<8x16xf32, #tpu.memory_space<vmem>>, vector<1x16xf32>
    tpu.vector_store %arg6[%60, %c0_21], %59 {strides = array<i32>} : memref<8x16xf32, #tpu.memory_space<vmem>>, vector<1x16xf32>,
    %c7_i32_22 = arith.constant 7 : i32
    %62 = arith.addi %2, %c7_i32_22 : i32
    %c7_i32_23 = arith.constant 7 : i32
    %63 = arith.minsi %62, %c7_i32_23 : i32
    %64 = arith.index_cast %63 : i32 to index
    %65 = memref.load %arg2[%64] : memref<8xi32, #tpu.memory_space<smem>>
    %66 = arith.index_cast %65 : i32 to index
    %c0_24 = arith.constant 0 : index
    %67 = vector.load %arg4[%66, %c0_24] : memref<32x16xf32, #tpu.memory_space<vmem>>, vector<1x16xf32>
    %68 = arith.index_cast %c7_i32_22 : i32 to index
    %c0_25 = arith.constant 0 : index
    %69 = vector.load %arg6[%68, %c0_25] : memref<8x16xf32, #tpu.memory_space<vmem>>, vector<1x16xf32>
    tpu.vector_store %arg6[%68, %c0_25], %67 {strides = array<i32>} : memref<8x16xf32, #tpu.memory_space<vmem>>, vector<1x16xf32>,
    %c8_i32_26 = arith.constant 8 : i32
    %c0_27 = arith.constant 0 : index
    %c0_28 = arith.constant 0 : index
    %70 = vector.load %arg3[%c0_27, %c0_28] : memref<8x16xf32, #tpu.memory_space<vmem>>, vector<8x16xf32>
    %c0_29 = arith.constant 0 : index
    %c0_30 = arith.constant 0 : index
    %71 = vector.load %arg6[%c0_29, %c0_30] : memref<8x16xf32, #tpu.memory_space<vmem>>, vector<8x16xf32>
    %c0_31 = arith.constant 0 : index
    %c0_32 = arith.constant 0 : index
    %72 = vector.load %arg7[%c0_31, %c0_32] : memref<1x1xf32, #tpu.memory_space<vmem>>, vector<1x1xf32>
    %73 = tpu.iota {dimensions = array<i32: 0>} : vector<8x1xi32>
    %74 = vector.broadcast %2 : i32 to vector<8x1xi32>
    %75 = arith.addi %73, %74 : vector<8x1xi32>
    %c8_i32_33 = arith.constant 8 : i32
    %76 = vector.broadcast %c8_i32_33 : i32 to vector<8x1xi32>
    %77 = arith.cmpi slt, %75, %76 : vector<8x1xi32>
    %cst = arith.constant 0.000000e+00 : f32
    %78 = vector.shape_cast %77 : vector<8x1xi1> to vector<8x1xi1>
    %79 = vector.broadcast %78 : vector<8x1xi1> to vector<8x16xi1>
    %80 = vector.broadcast %cst : f32 to vector<8x16xf32>
    %81 = arith.select %79, %70, %80 : vector<8x16xi1>, vector<8x16xf32>
    %cst_34 = arith.constant 0.000000e+00 : f32
    %82 = vector.shape_cast %77 : vector<8x1xi1> to vector<8x1xi1>
    %83 = vector.broadcast %82 : vector<8x1xi1> to vector<8x16xi1>
    %84 = vector.broadcast %cst_34 : f32 to vector<8x16xf32>
    %85 = arith.select %83, %71, %84 : vector<8x16xi1>, vector<8x16xf32>
    %cst_35 = arith.constant dense<0xFF800000> : vector<8xf32>
    %86 = vector.multi_reduction <maximumf>, %81, %cst_35 [1] : vector<8x16xf32> to vector<8xf32>
    %87 = vector.shape_cast %86 : vector<8xf32> to vector<8x1xf32>
    %88 = vector.broadcast %87 : vector<8x1xf32> to vector<8x16xf32>
    %89 = arith.subf %81, %88 : vector<8x16xf32>
    %90 = math.exp %89 : vector<8x16xf32>
    %cst_36 = arith.constant dense<0.000000e+00> : vector<8xf32>
    %91 = vector.multi_reduction <add>, %90, %cst_36 [1] : vector<8x16xf32> to vector<8xf32>
    %92 = vector.shape_cast %91 : vector<8xf32> to vector<8x1xf32>
    %93 = math.log %92 : vector<8x1xf32>
    %94 = arith.mulf %89, %85 : vector<8x16xf32>
    %cst_37 = arith.constant dense<0.000000e+00> : vector<8xf32>
    %95 = vector.multi_reduction <add>, %94, %cst_37 [1] : vector<8x16xf32> to vector<8xf32>
    %96 = vector.shape_cast %95 : vector<8xf32> to vector<8x1xf32>
    %cst_38 = arith.constant dense<0.000000e+00> : vector<8xf32>
    %97 = vector.multi_reduction <add>, %85, %cst_38 [1] : vector<8x16xf32> to vector<8xf32>
    %98 = vector.shape_cast %97 : vector<8xf32> to vector<8x1xf32>
    %99 = arith.mulf %93, %98 : vector<8x1xf32>
    %100 = arith.subf %96, %99 : vector<8x1xf32>
    %101 = vector.shape_cast %100 : vector<8x1xf32> to vector<1x8x1xf32>
    %cst_39 = arith.constant dense<0.000000e+00> : vector<1xf32>
    %102 = vector.multi_reduction <add>, %101, %cst_39 [1, 2] : vector<1x8x1xf32> to vector<1xf32>
    %103 = vector.shape_cast %102 : vector<1xf32> to vector<1x1x1xf32>
    %104 = vector.extract %103[0, 0, 0] : f32 from vector<1x1x1xf32>
    %105 = vector.broadcast %104 : f32 to vector<1x1xf32>
    %106 = arith.addf %72, %105 : vector<1x1xf32>
    %c0_40 = arith.constant 0 : index
    %c0_41 = arith.constant 0 : index
    %107 = vector.load %arg7[%c0_40, %c0_41] : memref<1x1xf32, #tpu.memory_space<vmem>>, vector<1x1xf32>
    tpu.vector_store %arg7[%c0_40, %c0_41], %106 {strides = array<i32>} : memref<1x1xf32, #tpu.memory_space<vmem>>, vector<1x1xf32>,
    %c0_i32_42 = arith.constant 0 : i32
    %108 = arith.cmpi eq, %arg1, %c0_i32_42 : i32
    %109 = arith.extui %108 : i1 to i32
    %c0_i32_43 = arith.constant 0 : i32
    %110 = arith.cmpi ne, %109, %c0_i32_43 : i32
    scf.if %110 {
      %111 = tpu.iota {dimensions = array<i32: 0>} : vector<8x128xi32>
      %112 = tpu.iota {dimensions = array<i32: 1>} : vector<8x128xi32>
      %c0_i32_44 = arith.constant 0 : i32
      %113 = vector.broadcast %c0_i32_44 : i32 to vector<8x128xi32>
      %114 = arith.cmpi eq, %111, %113 : vector<8x128xi32>
      %c0_i32_45 = arith.constant 0 : i32
      %115 = vector.broadcast %c0_i32_45 : i32 to vector<8x128xi32>
      %116 = arith.cmpi eq, %112, %115 : vector<8x128xi32>
      %117 = arith.andi %114, %116 : vector<8x128xi1>
      %c0_46 = arith.constant 0 : index
      %c0_47 = arith.constant 0 : index
      %118 = vector.load %arg7[%c0_46, %c0_47] : memref<1x1xf32, #tpu.memory_space<vmem>>, vector<1x1xf32>
      %cst_48 = arith.constant 0.000000e+00 : f32
      %119 = vector.shape_cast %118 : vector<1x1xf32> to vector<1x1xf32>
      %120 = vector.broadcast %119 : vector<1x1xf32> to vector<8x128xf32>
      %121 = vector.broadcast %cst_48 : f32 to vector<8x128xf32>
      %122 = arith.select %117, %120, %121 : vector<8x128xi1>, vector<8x128xf32>
      %c0_49 = arith.constant 0 : index
      %c0_50 = arith.constant 0 : index
      %123 = vector.load %arg5[%c0_49, %c0_50] : memref<8x128xf32, #tpu.memory_space<vmem>>, vector<8x128xf32>
      tpu.vector_store %arg5[%c0_49, %c0_50], %122 {strides = array<i32>} : memref<8x128xf32, #tpu.memory_space<vmem>>, vector<8x128xf32>,
    } else {
    }
    return
  }
  func.func @transform_0(%arg0: i32, %arg1: i32, %arg2: memref<8xi32, #tpu.memory_space<smem>>) -> (i32, i32) {
    %c1_i32 = arith.constant 1 : i32
    %0 = arith.muli %arg0, %c1_i32 : i32
    %1 = arith.addi %0, %arg1 : i32
    %c0_i32 = arith.constant 0 : i32
    %2 = arith.minsi %1, %c0_i32 : i32
    %c0_i32_0 = arith.constant 0 : i32
    %c0_i32_1 = arith.constant 0 : i32
    return %2, %c0_i32_0 : i32, i32
  }
  func.func @transform_1(%arg0: i32, %arg1: i32, %arg2: memref<8xi32, #tpu.memory_space<smem>>) -> (i32, i32) {
    %c0_i32 = arith.constant 0 : i32
    %c0_i32_0 = arith.constant 0 : i32
    %c0_i32_1 = arith.constant 0 : i32
    return %c0_i32, %c0_i32_0 : i32, i32
  }
  func.func @transform_2(%arg0: i32, %arg1: i32, %arg2: memref<8xi32, #tpu.memory_space<smem>>) -> (i32, i32) {
    %c0_i32 = arith.constant 0 : i32
    %c0_i32_0 = arith.constant 0 : i32
    return %arg0, %c0_i32 : i32, i32
  }
}

</mosaic_0001>

<llo_original>
// kernel: tpu_custom_call.1
$region0: #{tpu_custom_call.1}
  #allocation0 [shape = 'u32[]', space=smem, size = 0x4, offset = 0x4, fixed_abs, tag = 'smem constant byte address 0x4 - core index']
  #allocation1 [shape = 'u32[72,128]{1,0:T(1,128)}', space=vmem, size = 0x9000, scoped, tag = 'internal scratch']
  #allocation2 [shape = 'f32[8,16]{1,0:T(8,128)}', space=vmem, size = 0x1000, scoped, tag = 'scratch operand']
  #allocation3 [shape = 'f32[1,1]{1,0:T(1,128)}', space=vmem, size = 0x200, scoped, tag = 'scratch operand']
  #allocation4 [shape = 's32[1]{0}', space=sflag, size = 0x4, scoped, tag = 'scoped memory for tpu_custom_call.1']
  #allocation5 [shape = 'u8[512]{0}', space=smem, size = 0x200, scoped, tag = 'prefetched SMEM operand 0']
  %s0 = inlined_call_operand.vmem [shape: s32[8], index: 0, kind: input, shape index: {}]
  %s1 = inlined_call_operand.vmem [shape: f32[8,16], index: 1, kind: input, shape index: {}]
  %s2 = inlined_call_operand.vmem [shape: f32[32,16], index: 2, kind: input, shape index: {}]
  %s3 = inlined_call_operand.hbm [shape: f32[8,128], index: 3, kind: output, shape index: {}]
  %s4 = sld [smem:[#allocation0]]
  $region26: #{tpu_custom_call.1} parent=0
    _
  %s6 = ssub.s32 1, %s4
  %s7 = scalar_select 0, %s6, %s4
  %s9 = sshll.u32 %s0, 4
  %s10 = int_to_ptr.vmem [resolvable:$true] %s9
  %12 = dma.vmem_to_smem %s10, 16, [#allocation5], [#allocation4]
  %14 = dma.done [#allocation4], 16
  %15 = sfence
  $region1: #{tpu_custom_call.1} parent=0
    #allocation6 [shape = 'u8[4096]{0}', space=vmem, size = 0x1000, scoped, tag = 'output window, operand 0, single buffered']
    #allocation7 [shape = 's32[1]{0}', space=sflag, size = 0x4, scoped, tag = 'scoped memory for tpu_custom_call.1']
    %16 = vsyncpa [#allocation7], 0
    // Predicated region
    $region2: #{tpu_custom_call.1} parent=1 // pred_check
      _
    $region3: #{tpu_custom_call.1} parent=1 // pred_check_branch
      %18 = sbr.rel (0) target = $region5
    $region4: #{tpu_custom_call.1} parent=1 // pred_region
      %s19 = sadd.s32 0, 0
      %p20 = scmp.lt.s32.totalorder %s19, 0
      %s21 = scalar_select %p20, %s19, 0
      %p22 = scmp.lt.s32.totalorder %s21, 0
      %s23 = scalar_select %p22, %s21, 0
      %s24 = smul.addr %s23, 8
      %s25 = scalar_lea.vmem %s1, %s24
      %s26 = sadd.s32 0, 0
      %p27 = scmp.lt.s32.totalorder %s26, 0
      %s28 = scalar_select %p27, %s26, 0
    $region5: #{tpu_custom_call.1} parent=1 // pred_fallthru
      _
    // Predicated region
    $region6: #{tpu_custom_call.1} parent=1 // pred_check
      _
    $region7: #{tpu_custom_call.1} parent=1 // pred_check_branch
      %30 = sbr.rel (0) target = $region9
    $region8: #{tpu_custom_call.1} parent=1 // pred_region
      _
    $region9: #{tpu_custom_call.1} parent=1 // pred_fallthru
      _
    %s31 = sadd.s32 0, 0
    %p32 = scmp.lt.s32.totalorder %s31, 0
    %s33 = scalar_select %p32, %s31, 0
    %p34 = scmp.lt.s32.totalorder %s33, 0
    %s35 = scalar_select %p34, %s33, 0
    %s36 = smul.addr %s35, 8
    %s37 = scalar_lea.vmem %s1, %s36
    %s38 = sadd.s32 0, 0
    %p39 = scmp.lt.s32.totalorder %s38, 0
    %s40 = scalar_select %p39, %s38, 0
    %p41 = scmp.lt.s32.totalorder %s40, 0
    %s42 = scalar_select %p41, %s40, 0
    %s43 = smul.addr %s42, 8
    %s44 = scalar_lea.vmem %s1, %s43
    %s45 = sadd.s32 0, 0
    %p46 = scmp.lt.s32.totalorder %s45, 0
    %s47 = scalar_select %p46, %s45, 0
    %s48 = sadd.s32 0, 0
    %s49 = smul.u32 %s48, 8
    %p50 = scmp.eq.s32.totalorder 0, 0
    // Predicated region
    $region10: #{tpu_custom_call.1} parent=1 // pred_check
      %p51 = pneg %p50
    $region11: #{tpu_custom_call.1} parent=1 // pred_check_branch
      %53 = sbr.rel (%p51) target = $region13
    $region12: #{tpu_custom_call.1} parent=1 // pred_region
      %vm54 = vcmask 0
      %55 = vst.msk [vmem:[#allocation3] sm:$0x1] %vm54, 0.0
    $region13: #{tpu_custom_call.1} parent=1 // pred_fallthru
      _
    %p56 = scmp.lt.s32.totalorder %s49, 7
    %s57 = scalar_select %p56, %s49, 7
    %s58 = sld [smem:[#allocation5 + %s57]]
    %s59 = scalar_lea.vmem %s2, %s58
    %v60 = vld [vmem:[%s59] sm:$0x1]
    %vm61 = vcmask 122880
    %62 = vst.msk [vmem:[#allocation2] sm:$0x1] %vm61, %v60
    %s63 = sadd.s32 %s49, 1
    %p64 = scmp.lt.s32.totalorder %s63, 7
    %s65 = scalar_select %p64, %s63, 7
    %s66 = sld [smem:[#allocation5 + %s65]]
    %s67 = scalar_lea.vmem %s2, %s66
    %v68 = vld [vmem:[%s67] sm:$0x1]
    %69 = vst.msk [vmem:[#allocation2 + $0x1] sm:$0x1] %vm61, %v68
    %s70 = sadd.s32 %s49, 2
    %p71 = scmp.lt.s32.totalorder %s70, 7
    %s72 = scalar_select %p71, %s70, 7
    %s73 = sld [smem:[#allocation5 + %s72]]
    %s74 = scalar_lea.vmem %s2, %s73
    %v75 = vld [vmem:[%s74] sm:$0x1]
    %76 = vst.msk [vmem:[#allocation2 + $0x2] sm:$0x1] %vm61, %v75
    %s77 = sadd.s32 %s49, 3
    %p78 = scmp.lt.s32.totalorder %s77, 7
    %s79 = scalar_select %p78, %s77, 7
    %s80 = sld [smem:[#allocation5 + %s79]]
    %s81 = scalar_lea.vmem %s2, %s80
    %v82 = vld [vmem:[%s81] sm:$0x1]
    %83 = vst.msk [vmem:[#allocation2 + $0x3] sm:$0x1] %vm61, %v82
    %s84 = sadd.s32 %s49, 4
    %p85 = scmp.lt.s32.totalorder %s84, 7
    %s86 = scalar_select %p85, %s84, 7
    %s87 = sld [smem:[#allocation5 + %s86]]
    %s88 = scalar_lea.vmem %s2, %s87
    %v89 = vld [vmem:[%s88] sm:$0x1]
    %90 = vst.msk [vmem:[#allocation2 + $0x4] sm:$0x1] %vm61, %v89
    %s91 = sadd.s32 %s49, 5
    %p92 = scmp.lt.s32.totalorder %s91, 7
    %s93 = scalar_select %p92, %s91, 7
    %s94 = sld [smem:[#allocation5 + %s93]]
    %s95 = scalar_lea.vmem %s2, %s94
    %v96 = vld [vmem:[%s95] sm:$0x1]
    %97 = vst.msk [vmem:[#allocation2 + $0x5] sm:$0x1] %vm61, %v96
    %s98 = sadd.s32 %s49, 6
    %p99 = scmp.lt.s32.totalorder %s98, 7
    %s100 = scalar_select %p99, %s98, 7
    %s101 = sld [smem:[#allocation5 + %s100]]
    %s102 = scalar_lea.vmem %s2, %s101
    %v103 = vld [vmem:[%s102] sm:$0x1]
    %104 = vst.msk [vmem:[#allocation2 + $0x6] sm:$0x1] %vm61, %v103
    %s105 = sadd.s32 %s49, 7
    %p106 = scmp.lt.s32.totalorder %s105, 7
    %s107 = scalar_select %p106, %s105, 7
    %s108 = sld [smem:[#allocation5 + %s107]]
    %s109 = scalar_lea.vmem %s2, %s108
    %v110 = vld [vmem:[%s109] sm:$0x1]
    %111 = vst.msk [vmem:[#allocation2 + $0x7] sm:$0x1] %vm61, %v110
    %v112 = vld [vmem:[%s44] sm:$0xff]
    %v113 = vld [vmem:[#allocation2] sm:$0xff]
    %v114 = vld [vmem:[#allocation3] sm:$0x1]
    %v115 = vlaneseq
    %v116 = vshrl.u32 %v115, 7
    %v117 = vstv %s49
    %v118 = vadd.s32 %v116, %v117
    %vm119 = vcmp.lt.s32.totalorder %v118, 8
    %v120 = vsel %vm119, 1, 0
    %vm121 = vcmp.eq.s32.totalorder %v120, 1
    %v122 = vsel %vm121, %v112, 0.0
    %v123 = vsel %vm121, %v113, 0.0
    %vm124 = vcmask 130048
    %v125 = vsel %vm124, %v122, -inf
    %126 = vmax.xlane.f32.xlu0 %v125
    %v127 = vpop.xlane.xlu0 %126
    %v128 = vsub.f32 %v122, %v127
    %v129 = vmul.f32 %v128, 1.442695
    %v130 = vpow.pop %v129
    %v131 = vsel %vm124, %v130, 0.0
    %132 = vadd.xlane.f32.xlu0 %v131
    %v133 = vpop.xlane.xlu0 %132
    %v134 = vlog2.pop %v133
    %v135 = vmul.f32 %v134, 0.6931472
    %v136 = vmul.f32 %v128, %v123
    %v137 = vsel %vm124, %v136, 0.0
    %138 = vadd.xlane.f32.xlu0 %v137
    %v139 = vpop.xlane.xlu0 %138
    %v140 = vsel %vm124, %v123, 0.0
    %141 = vadd.xlane.f32.xlu0 %v140
    %v142 = vpop.xlane.xlu0 %141
    %v143 = vmul.f32 %v135, %v142
    %v144 = vsub.f32 %v139, %v143
    %vm145 = vcmask 7168
    %v146 = vsel %vm145, %v144, 0.0
    %147 = vadd.xlane.f32.xlu0 %v146
    %v148 = vpop.xlane.xlu0 %147
    %v149 = vrot.slane %v148, 4
    %v150 = vadd.f32 %v148, %v149
    %v151 = vrot.slane %v150, 2
    %v152 = vadd.f32 %v150, %v151
    %v153 = vrot.slane %v152, 1
    %v154 = vadd.f32 %v152, %v153
    %s155 = vtos %v154
    %v156 = vstv %s155
    %v157 = vadd.f32 %v114, %v156
    %vm158 = vcmask 0
    %159 = vst.msk [vmem:[#allocation3] sm:$0x1] %vm158, %v157
    // Predicated region
    $region14: #{tpu_custom_call.1} parent=1 // pred_check
      %p160 = pneg %p50
    $region15: #{tpu_custom_call.1} parent=1 // pred_check_branch
      %162 = sbr.rel (%p160) target = $region17
    $region16: #{tpu_custom_call.1} parent=1 // pred_region
      %v163 = vlaneseq
      %v164 = vand.u32 %v163, 127
      %vm165 = vcmp.eq.s32.totalorder %v116, 0
      %vm166 = vcmp.eq.s32.totalorder %v164, 0
      %vm167 = vmand %vm165, %vm166
      %v168 = vld [vmem:[#allocation3] sm:$0x1]
      %v170 = vperm.slane %v168, 0
      %171 = vset.pattern.permute.xlu0 0
      %172 = vperm.xlu0 %171, %v170
      %v173 = vpop.permute.xlu0 %172
      %v175 = vsel %vm167, %v173, 0.0
      %176 = vst [vmem:[#allocation6] sm:$0xff] %v175
    $region17: #{tpu_custom_call.1} parent=1 // pred_fallthru
      _
    // Predicated region
    $region18: #{tpu_custom_call.1} parent=1 // pred_check
      _
    $region19: #{tpu_custom_call.1} parent=1 // pred_check_branch
      %178 = sbr.rel (0) target = $region21
    $region20: #{tpu_custom_call.1} parent=1 // pred_region
      %180 = vsyncadd [#allocation7], 0
      %s182 = sshll.u32 [#allocation6], 4
      %s183 = int_to_ptr.vmem [resolvable:$true] %s182
      %s184 = sshll.u32 %s3, 4
      %s185 = int_to_ptr.hbm [resolvable:$true] %s184
      %187 = dma.vmem_to_hbm [thread:$0]  %s183, 128, %s185, [#allocation7]
    $region21: #{tpu_custom_call.1} parent=1 // pred_fallthru
      _
    // Predicated region
    $region22: #{tpu_custom_call.1} parent=1 // pred_check
      _
    $region23: #{tpu_custom_call.1} parent=1 // pred_check_branch
      %189 = sbr.rel (0) target = $region25
    $region24: #{tpu_custom_call.1} parent=1 // pred_region
      %191 = dma.done [#allocation7], 128
    $region25: #{tpu_custom_call.1} parent=1 // pred_fallthru
      _
    %192 = vsyncpa [#allocation7], 1

</llo_original>
